<compile_context>
chip_gen: v5e
topology: v5e:2x2
jax: 0.10.0
libtpu: 0.0.40
codegen_flags: <defaults>
</compile_context>

<pallas_src>
import functools

import jax
import jax.numpy as jnp
from jax import lax
from jax.experimental import pallas as pl
from jax.experimental.pallas import tpu as pltpu


def _round_up(x, m):
    return (x + m - 1) // m * m


def _center_loss_kernel(x_ref, ct_ref, csq_ref, lbl_ref, out_c_ref, out_t_ref, *,
                        num_classes, need_col_mask, need_row_mask):
    x = x_ref[...]                                   # (TB, Dp)  native dtype
    labels = lbl_ref[...]                            # (TB, 1)   int32, -1 marks padded rows

    # MXU: x @ (-2 * centers)^T fed K-major (transpose and -2 folded in the wrapper),
    # f32 accumulation.  Transpose-free, grid-invariant RHS block.
    xc = lax.dot_general(
        x, ct_ref[...],
        dimension_numbers=(((1,), (0,)), ((), ())),
        preferred_element_type=jnp.float32)          # (TB, Cp) f32

    xf = x.astype(jnp.float32)
    x_sq = jnp.sum(xf * xf, axis=1, keepdims=True)   # (TB, 1)  f32
    # clamp BEFORE any masking (matches the module; also makes sep = total - center exact).
    distmat = jnp.clip(x_sq + csq_ref[...] + xc, 1e-12, 1.0e12)   # (TB, Cp)

    # Class iota / masks built lane-wide only, (1, Cp); broadcast happens in the compares.
    classes = lax.broadcasted_iota(jnp.int32, (1, distmat.shape[1]), 1)

    # Own-class entries: padded rows carry label -1 and padded columns are >= num_classes,
    # so the raw (clipped) distmat can be masked directly -- no validity mask needed here.
    own = labels == classes                          # (TB, Cp) via broadcast
    center_part = jnp.where(own, distmat, 0.0)

    # Valid entries (exclude padded rows / columns); only materialized when padding
    # actually happened (static flags).
    if need_col_mask or need_row_mask:
        valid = None
        if need_col_mask:
            valid = classes < num_classes            # (1, Cp)
        if need_row_mask:
            row_valid = labels >= 0                  # (TB, 1)
            valid = row_valid if valid is None else (valid & row_valid)
        total_part = jnp.where(valid, distmat, 0.0)
    else:
        total_part = distmat

    # Fold (TB, Cp) -> (8, Cp) with pure VPU adds (layout-preserving reshape; no
    # cross-lane reduce per step).  The final cross-lane reduce is done once, in the
    # wrapper, over the tiny per-tile partials.
    tb, cp = distmat.shape
    out_c_ref[...] = jnp.sum(center_part.reshape(tb // 8, 8, cp), axis=0)
    out_t_ref[...] = jnp.sum(total_part.reshape(tb // 8, 8, cp), axis=0)


def center_loss(x, centers, labels, *, tile_b=1024):
    """Pallas implementation of CenterLoss.forward(x, labels)."""
    b, d = x.shape
    nc, d2 = centers.shape
    assert d == d2, "feature dims of x and centers must match"
    assert nc > 1

    x_item = jnp.dtype(x.dtype).itemsize
    c_item = jnp.dtype(centers.dtype).itemsize
    sub = max(8, 32 // x_item)            # dtype-correct sublane multiple (8/16/32)

    d_pad = _round_up(d, 128)             # MXU contraction (K) width
    c_pad = _round_up(nc, 128)            # lane dim of distmat (MXU N)

    # --- VMEM limit / budget from the actual chip (v7x: 64 MiB/TC; v5e/v6e: 128 MiB)
    try:
        vmem_cap = int(pltpu.get_tpu_info().vmem_capacity_bytes)
    except Exception:
        vmem_cap = 64 * 1024 * 1024       # conservative (v7x per-TC) fallback
    vmem_limit = min(int(vmem_cap * 0.7), 72 * 1024 * 1024)
    vmem_budget = int(vmem_limit * 0.8)

    # resident: double-buffered K-major centers block + ||c||^2
    resident = 2 * d_pad * c_pad * c_item + 2 * 8 * c_pad * 4
    # per batch row: double-buffered x tile + lane-padded labels tile (tb x 128 x 4B)
    #                + ~4 live (TB, Cp) f32 temporaries (distmat / masked copies)
    per_row = 2 * d_pad * x_item + 2 * 128 * 4 + 4 * c_pad * 4
    tb_cap = max(sub, (max(vmem_budget - resident, 0) // per_row) // sub * sub)

    # --- adaptive batch tile: pad by at most ~one sublane group per tile -----
    tb_req = max(sub, min(_round_up(tile_b, sub), tb_cap, _round_up(b, sub)))
    n_tiles = -(-b // tb_req)                 # ceil
    tb = _round_up(-(-b // n_tiles), sub)     # even split, sublane aligned
    b_pad = n_tiles * tb

    need_col_mask = c_pad != nc
    need_row_mask = b_pad != b

    # --- prepare operands (skip copies entirely when already aligned) --------
    if b_pad == b and d_pad == d:
        xp = x                                            # no extra HBM pass
    else:
        xp = jnp.pad(x, ((0, b_pad - b), (0, d_pad - d)))
    if need_col_mask or d_pad != d:
        cp_full = jnp.pad(centers, ((0, c_pad - nc), (0, d_pad - d)))
    else:
        cp_full = centers
    cpf = cp_full.astype(jnp.float32)
    csq = jnp.sum(cpf * cpf, axis=1)[None, :]             # (1, Cp) f32, grid-invariant
    ct = (cp_full * jnp.asarray(-2, cp_full.dtype)).T     # (Dp, Cp): K-major, -2 folded (exact)
    lbl = labels.astype(jnp.int32)
    lp = (lbl if b_pad == b
          else jnp.pad(lbl, (0, b_pad - b), constant_values=-1))[:, None]

    kernel = functools.partial(
        _center_loss_kernel,
        num_classes=nc,
        need_col_mask=need_col_mask,
        need_row_mask=need_row_mask,
    )

    cost = pl.CostEstimate(
        flops=2 * b_pad * c_pad * d_pad + 10 * b_pad * c_pad,
        transcendentals=0,
        bytes_accessed=(b_pad * d_pad * x_item + d_pad * c_pad * c_item
                        + c_pad * 4 + b_pad * 128 * 4
                        + 2 * n_tiles * 8 * c_pad * 4),
    )

    out_c, out_t = pl.pallas_call(
        kernel,
        out_shape=(jax.ShapeDtypeStruct((n_tiles, 8, c_pad), jnp.float32),
                   jax.ShapeDtypeStruct((n_tiles, 8, c_pad), jnp.float32)),
        grid_spec=pltpu.PrefetchScalarGridSpec(
            num_scalar_prefetch=0,
            grid=(n_tiles,),
            in_specs=[
                pl.BlockSpec((tb, d_pad), lambda i: (i, 0)),      # x tile (streamed)
                pl.BlockSpec((d_pad, c_pad), lambda i: (0, 0)),   # -2*centers^T (resident)
                pl.BlockSpec((1, c_pad), lambda i: (0, 0)),       # ||c||^2 (resident)
                pl.BlockSpec((tb, 1), lambda i: (i, 0)),          # labels tile
            ],
            out_specs=[
                pl.BlockSpec((None, 8, c_pad), lambda i: (i, 0, 0)),  # per-tile center partials
                pl.BlockSpec((None, 8, c_pad), lambda i: (i, 0, 0)),  # per-tile total partials
            ],
        ),
        compiler_params=pltpu.CompilerParams(
            # No cross-step dependencies -> batch axis is truly parallel
            # (megacore-shardable on v7x).
            dimension_semantics=("parallel",),
            vmem_limit_bytes=vmem_limit,
        ),
        cost_estimate=cost,
    )(xp, ct, csq, lp)

    # Tiny combine + epilogue in the wrapper (one cross-lane reduce total).
    center_sum = jnp.sum(out_c)
    total_sum = jnp.sum(out_t)
    sep_sum = total_sum - center_sum                      # exact: clamp precedes masking
    center_loss_v = center_sum / jnp.float32(b)
    sep_loss_v = sep_sum / jnp.float32(b * (nc - 1))
    return center_loss_v - 0.001 * sep_loss_v


def center_loss_ref(x, centers, labels):
    """Plain-JAX reference mirroring the PyTorch forward."""
    b = x.shape[0]
    nc = centers.shape[0]
    distmat = (
        jnp.sum(x * x, axis=1, keepdims=True)
        + jnp.sum(centers * centers, axis=1)[None, :]
        - 2.0 * jnp.matmul(x, centers.T, precision=jax.lax.Precision.HIGHEST)
    )
    distmat = jnp.clip(distmat, 1e-12, 1.0e12)
    mask = labels[:, None] == jnp.arange(nc)[None, :]
    center_loss_v = jnp.sum(jnp.where(mask, distmat, 0.0)) / b
    sep_loss_v = jnp.sum(jnp.where(mask, 0.0, distmat)) / (b * (nc - 1))
    return center_loss_v - 0.001 * sep_loss_v


if __name__ == "__main__":
    key = jax.random.PRNGKey(0)

    # --- Test 1: small shapes, single tile, column padding only --------------
    num_classes, feat_dim, batch = 16, 32, 8
    kx, kc, kl = jax.random.split(key, 3)
    x = jax.random.normal(kx, (batch, feat_dim), dtype=jnp.float32)
    init_centers = jax.random.normal(kc, (num_classes, feat_dim), dtype=jnp.float32)
    labels = jax.random.randint(kl, (batch,), 0, num_classes, dtype=jnp.int32)

    loss = jax.block_until_ready(center_loss(x, init_centers, labels))
    ref = center_loss_ref(x, init_centers, labels)
    assert jnp.allclose(loss, ref, rtol=1e-5, atol=1e-4), (loss, ref)

    # --- Test 2: multi-tile grid, row + column padding ------------------------
    num_classes, feat_dim, batch = 20, 40, 24
    kx, kc, kl = jax.random.split(jax.random.PRNGKey(1), 3)
    x2 = jax.random.normal(kx, (batch, feat_dim), dtype=jnp.float32)
    c2 = jax.random.normal(kc, (num_classes, feat_dim), dtype=jnp.float32)
    l2 = jax.random.randint(kl, (batch,), 0, num_classes, dtype=jnp.int32)

    loss2 = jax.block_until_ready(center_loss(x2, c2, l2, tile_b=16))
    ref2 = center_loss_ref(x2, c2, l2)
    assert jnp.allclose(loss2, ref2, rtol=1e-5, atol=1e-4), (loss2, ref2)

    print("KERNEL_OK")
</pallas_src>

<mosaic_0001>
module attributes {stable_mosaic.version = 11 : i64} {
  func.func @_center_loss_kernel(%arg0: i32, %arg1: memref<8x128xf32, #tpu.memory_space<vmem>>, %arg2: memref<128x128xf32, #tpu.memory_space<vmem>>, %arg3: memref<1x128xf32, #tpu.memory_space<vmem>>, %arg4: memref<8x1xi32, #tpu.memory_space<vmem>>, %arg5: memref<1x8x128xf32, #tpu.memory_space<vmem>>, %arg6: memref<1x8x128xf32, #tpu.memory_space<vmem>>) attributes {dimension_semantics = [#tpu.dimension_semantics<parallel>], iteration_bounds = array<i64: 1>, scalar_prefetch = 0 : i64, scratch_operands = 0 : i64, tpu.core_type = #tpu.core_type<tc>, window_params = [{transform_indices = @transform_0, window_bounds = array<i64: 8, 128>}, {pipeline_mode = #tpu.pipeline_mode<synchronous>, transform_indices = @transform_1, window_bounds = array<i64: 128, 128>}, {pipeline_mode = #tpu.pipeline_mode<synchronous>, transform_indices = @transform_2, window_bounds = array<i64: 1, 128>}, {transform_indices = @transform_3, window_bounds = array<i64: 8, 1>}, {transform_indices = @transform_4, window_bounds = array<i64: 1, 8, 128>}, {transform_indices = @transform_5, window_bounds = array<i64: 1, 8, 128>}]} {
    %c0 = arith.constant 0 : index
    %c0_0 = arith.constant 0 : index
    %0 = vector.load %arg1[%c0, %c0_0] : memref<8x128xf32, #tpu.memory_space<vmem>>, vector<8x128xf32>
    %c0_1 = arith.constant 0 : index
    %c0_2 = arith.constant 0 : index
    %1 = vector.load %arg4[%c0_1, %c0_2] : memref<8x1xi32, #tpu.memory_space<vmem>>, vector<8x1xi32>
    %c0_3 = arith.constant 0 : index
    %c0_4 = arith.constant 0 : index
    %2 = vector.load %arg2[%c0_3, %c0_4] : memref<128x128xf32, #tpu.memory_space<vmem>>, vector<128x128xf32>
    %cst = arith.constant dense<0.000000e+00> : vector<8x128xf32>
    %3 = tpu.matmul %0, %2, %cst {dimension_numbers = #tpu.dot_dimension_numbers<[1], [0], [0], [1], [0, 0, 1, 1], [], []>} : vector<8x128xf32>, vector<128x128xf32>, vector<8x128xf32> -> vector<8x128xf32>
    %4 = arith.mulf %0, %0 : vector<8x128xf32>
    %cst_5 = arith.constant dense<0.000000e+00> : vector<8xf32>
    %5 = vector.multi_reduction <add>, %4, %cst_5 [1] : vector<8x128xf32> to vector<8xf32>
    %6 = vector.shape_cast %5 : vector<8xf32> to vector<8x1xf32>
    %c0_6 = arith.constant 0 : index
    %c0_7 = arith.constant 0 : index
    %7 = vector.load %arg3[%c0_6, %c0_7] : memref<1x128xf32, #tpu.memory_space<vmem>>, vector<1x128xf32>
    %8 = vector.broadcast %6 : vector<8x1xf32> to vector<8x128xf32>
    %9 = vector.broadcast %7 : vector<1x128xf32> to vector<8x128xf32>
    %10 = arith.addf %8, %9 : vector<8x128xf32>
    %11 = arith.addf %10, %3 : vector<8x128xf32>
    %cst_8 = arith.constant 9.99999996E-13 : f32
    %cst_9 = arith.constant 9.99999995E+11 : f32
    %12 = vector.broadcast %cst_8 : f32 to vector<8x128xf32>
    %13 = arith.maximumf %12, %11 : vector<8x128xf32>
    %14 = vector.broadcast %cst_9 : f32 to vector<8x128xf32>
    %15 = arith.minimumf %14, %13 : vector<8x128xf32>
    %16 = tpu.iota {dimensions = array<i32: 1>} : vector<1x128xi32>
    %17 = vector.broadcast %1 : vector<8x1xi32> to vector<8x128xi32>
    %18 = vector.broadcast %16 : vector<1x128xi32> to vector<8x128xi32>
    %19 = arith.cmpi eq, %17, %18 : vector<8x128xi32>
    %cst_10 = arith.constant 0.000000e+00 : f32
    %20 = vector.broadcast %cst_10 : f32 to vector<8x128xf32>
    %21 = arith.select %19, %15, %20 : vector<8x128xi1>, vector<8x128xf32>
    %c16_i32 = arith.constant 16 : i32
    %22 = vector.broadcast %c16_i32 : i32 to vector<1x128xi32>
    %23 = arith.cmpi slt, %16, %22 : vector<1x128xi32>
    %cst_11 = arith.constant 0.000000e+00 : f32
    %24 = vector.shape_cast %23 : vector<1x128xi1> to vector<1x128xi1>
    %25 = vector.broadcast %24 : vector<1x128xi1> to vector<8x128xi1>
    %26 = vector.broadcast %cst_11 : f32 to vector<8x128xf32>
    %27 = arith.select %25, %15, %26 : vector<8x128xi1>, vector<8x128xf32>
    %28 = vector.shape_cast %21 : vector<8x128xf32> to vector<1x8x128xf32>
    %cst_12 = arith.constant dense<0.000000e+00> : vector<8x128xf32>
    %29 = vector.multi_reduction <add>, %28, %cst_12 [0] : vector<1x8x128xf32> to vector<8x128xf32>
    %c0_13 = arith.constant 0 : index
    %c0_14 = arith.constant 0 : index
    %c0_15 = arith.constant 0 : index
    %30 = vector.load %arg5[%c0_13, %c0_14, %c0_15] : memref<1x8x128xf32, #tpu.memory_space<vmem>>, vector<1x8x128xf32>
    %31 = vector.shape_cast %30 : vector<1x8x128xf32> to vector<8x128xf32>
    %32 = vector.shape_cast %29 : vector<8x128xf32> to vector<1x8x128xf32>
    tpu.vector_store %arg5[%c0_13, %c0_14, %c0_15], %32 {strides = array<i32>} : memref<1x8x128xf32, #tpu.memory_space<vmem>>, vector<1x8x128xf32>,
    %33 = vector.shape_cast %27 : vector<8x128xf32> to vector<1x8x128xf32>
    %cst_16 = arith.constant dense<0.000000e+00> : vector<8x128xf32>
    %34 = vector.multi_reduction <add>, %33, %cst_16 [0] : vector<1x8x128xf32> to vector<8x128xf32>
    %c0_17 = arith.constant 0 : index
    %c0_18 = arith.constant 0 : index
    %c0_19 = arith.constant 0 : index
    %35 = vector.load %arg6[%c0_17, %c0_18, %c0_19] : memref<1x8x128xf32, #tpu.memory_space<vmem>>, vector<1x8x128xf32>
    %36 = vector.shape_cast %35 : vector<1x8x128xf32> to vector<8x128xf32>
    %37 = vector.shape_cast %34 : vector<8x128xf32> to vector<1x8x128xf32>
    tpu.vector_store %arg6[%c0_17, %c0_18, %c0_19], %37 {strides = array<i32>} : memref<1x8x128xf32, #tpu.memory_space<vmem>>, vector<1x8x128xf32>,
    return
  }
  func.func @transform_0(%arg0: i32) -> (i32, i32) {
    %c0_i32 = arith.constant 0 : i32
    %c0_i32_0 = arith.constant 0 : i32
    return %arg0, %c0_i32 : i32, i32
  }
  func.func @transform_1(%arg0: i32) -> (i32, i32) {
    %c0_i32 = arith.constant 0 : i32
    %c0_i32_0 = arith.constant 0 : i32
    %c0_i32_1 = arith.constant 0 : i32
    return %c0_i32, %c0_i32_0 : i32, i32
  }
  func.func @transform_2(%arg0: i32) -> (i32, i32) {
    %c0_i32 = arith.constant 0 : i32
    %c0_i32_0 = arith.constant 0 : i32
    %c0_i32_1 = arith.constant 0 : i32
    return %c0_i32, %c0_i32_0 : i32, i32
  }
  func.func @transform_3(%arg0: i32) -> (i32, i32) {
    %c0_i32 = arith.constant 0 : i32
    %c0_i32_0 = arith.constant 0 : i32
    return %arg0, %c0_i32 : i32, i32
  }
  func.func @transform_4(%arg0: i32) -> (i32, i32, i32) {
    %c0_i32 = arith.constant 0 : i32
    %c0_i32_0 = arith.constant 0 : i32
    %c0_i32_1 = arith.constant 0 : i32
    return %arg0, %c0_i32, %c0_i32_0 : i32, i32, i32
  }
  func.func @transform_5(%arg0: i32) -> (i32, i32, i32) {
    %c0_i32 = arith.constant 0 : i32
    %c0_i32_0 = arith.constant 0 : i32
    %c0_i32_1 = arith.constant 0 : i32
    return %arg0, %c0_i32, %c0_i32_0 : i32, i32, i32
  }
}

</mosaic_0001>

<llo_original>
// kernel: tpu_custom_call.1
$region0: #{tpu_custom_call.1}
  #allocation0 [shape = 'u32[]', space=smem, size = 0x4, offset = 0x4, fixed_abs, tag = 'smem constant byte address 0x4 - core index']
  #allocation1 [shape = 'u32[72,128]{1,0:T(1,128)}', space=vmem, size = 0x9000, scoped, tag = 'internal scratch']
  %s0 = inlined_call_operand.vmem [shape: f32[8,128], index: 0, kind: input, shape index: {}]
  %s1 = inlined_call_operand.hbm [shape: f32[128,128], index: 1, kind: input, shape index: {}]
  %s2 = inlined_call_operand.vmem [shape: f32[1,128], index: 2, kind: input, shape index: {}]
  %s3 = inlined_call_operand.vmem [shape: s32[8,1], index: 3, kind: input, shape index: {}]
  %s4 = inlined_call_operand.hbm [shape: f32[1,8,128], index: 4, kind: output, shape index: {0}]
  %s5 = inlined_call_operand.hbm [shape: f32[1,8,128], index: 5, kind: output, shape index: {1}]
  %6 = xla_tuple %s4, %s5
  %s7 = sld [smem:[#allocation0]]
  $region38: #{tpu_custom_call.1} parent=0
    _
  %s9 = ssub.s32 1, %s7
  %s10 = scalar_select 0, %s9, %s7
  $region1: #{tpu_custom_call.1} parent=0
    #allocation2 [shape = 'u8[65536]{0}', space=vmem, size = 0x10000, scoped, tag = 'input window, operand 1, single buffered']
    #allocation3 [shape = 's32[1]{0}', space=sflag, size = 0x4, scoped, tag = 'scoped memory for tpu_custom_call.1']
    #allocation4 [shape = 's32[1]{0}', space=sflag, size = 0x4, scoped, tag = 'scoped memory for tpu_custom_call.1']
    #allocation5 [shape = 'u8[4096]{0}', space=vmem, size = 0x1000, scoped, tag = 'output window, operand 0, single buffered']
    #allocation6 [shape = 'u8[4096]{0}', space=vmem, size = 0x1000, scoped, tag = 'output window, operand 1, single buffered']
    #allocation7 [shape = 's32[1]{0}', space=sflag, size = 0x4, scoped, tag = 'scoped memory for tpu_custom_call.1']
    %11 = vsyncpa [#allocation3], 0
    %12 = vsyncpa [#allocation4], 0
    %13 = vsyncpa [#allocation7], 0
    // Predicated region
    $region2: #{tpu_custom_call.1} parent=1 // pred_check
      _
    $region3: #{tpu_custom_call.1} parent=1 // pred_check_branch
      %15 = sbr.rel (0) target = $region5
    $region4: #{tpu_custom_call.1} parent=1 // pred_region
      _
    $region5: #{tpu_custom_call.1} parent=1 // pred_fallthru
      _
    // Predicated region
    $region6: #{tpu_custom_call.1} parent=1 // pred_check
      _
    $region7: #{tpu_custom_call.1} parent=1 // pred_check_branch
      %17 = sbr.rel (0) target = $region9
    $region8: #{tpu_custom_call.1} parent=1 // pred_region
      %19 = vsyncadd [#allocation3], 0
      %s20 = sshll.u32 %s1, 4
      %s21 = int_to_ptr.hbm [resolvable:$true] %s20
      %s22 = sshll.u32 [#allocation2], 4
      %s23 = int_to_ptr.vmem [resolvable:$true] %s22
      %28 = dma.hbm_to_vmem [thread:$0]  %s21, 2048, %s23, [#allocation3], 128, 128, 8
    $region9: #{tpu_custom_call.1} parent=1 // pred_fallthru
      _
    // Predicated region
    $region10: #{tpu_custom_call.1} parent=1 // pred_check
      _
    $region11: #{tpu_custom_call.1} parent=1 // pred_check_branch
      %30 = sbr.rel (0) target = $region13
    $region12: #{tpu_custom_call.1} parent=1 // pred_region
      _
    $region13: #{tpu_custom_call.1} parent=1 // pred_fallthru
      _
    // Predicated region
    $region14: #{tpu_custom_call.1} parent=1 // pred_check
      _
    $region15: #{tpu_custom_call.1} parent=1 // pred_check_branch
      %32 = sbr.rel (0) target = $region17
    $region16: #{tpu_custom_call.1} parent=1 // pred_region
      _
    $region17: #{tpu_custom_call.1} parent=1 // pred_fallthru
      _
    // Predicated region
    $region18: #{tpu_custom_call.1} parent=1 // pred_check
      _
    $region19: #{tpu_custom_call.1} parent=1 // pred_check_branch
      %34 = sbr.rel (0) target = $region21
    $region20: #{tpu_custom_call.1} parent=1 // pred_region
      %36 = dma.done [#allocation3], 2048
    $region21: #{tpu_custom_call.1} parent=1 // pred_fallthru
      _
    %v37 = vld [vmem:[%s0] sm:$0xff]
    %v38 = vld [vmem:[%s3] sm:$0xff]
    %v39 = vld [vmem:[#allocation2] sm:$0xff]
    %v40 = vld [vmem:[#allocation2 + $0x8] sm:$0xff]
    %v41 = vld [vmem:[#allocation2 + $0x10] sm:$0xff]
    %v42 = vld [vmem:[#allocation2 + $0x18] sm:$0xff]
    %v43 = vld [vmem:[#allocation2 + $0x20] sm:$0xff]
    %v44 = vld [vmem:[#allocation2 + $0x28] sm:$0xff]
    %v45 = vld [vmem:[#allocation2 + $0x30] sm:$0xff]
    %v46 = vld [vmem:[#allocation2 + $0x38] sm:$0xff]
    %v47 = vld [vmem:[#allocation2 + $0x40] sm:$0xff]
    %v48 = vld [vmem:[#allocation2 + $0x48] sm:$0xff]
    %v49 = vld [vmem:[#allocation2 + $0x50] sm:$0xff]
    %v50 = vld [vmem:[#allocation2 + $0x58] sm:$0xff]
    %v51 = vld [vmem:[#allocation2 + $0x60] sm:$0xff]
    %v52 = vld [vmem:[#allocation2 + $0x68] sm:$0xff]
    %v53 = vld [vmem:[#allocation2 + $0x70] sm:$0xff]
    %v54 = vld [vmem:[#allocation2 + $0x78] sm:$0xff]
    %55 = vmatpush.msra.mxu0 %v54
    %56 = vmatpush.msra.mxu0 %v53
    %57 = vmatpush.msra.mxu0 %v52
    %58 = vmatpush.msra.mxu0 %v51
    %59 = vmatpush.msra.mxu0 %v50
    %60 = vmatpush.msra.mxu0 %v49
    %61 = vmatpush.msra.mxu0 %v48
    %62 = vmatpush.msra.mxu0 %v47
    %63 = vmatpush.msra.mxu0 %v46
    %64 = vmatpush.msra.mxu0 %v45
    %65 = vmatpush.msra.mxu0 %v44
    %66 = vmatpush.msra.mxu0 %v43
    %67 = vmatpush.msra.mxu0 %v42
    %68 = vmatpush.msra.mxu0 %v41
    %69 = vmatpush.msra.mxu0 %v40
    %70 = vmatpush.msra.mxu0 %v39
    %71 = vmatmul.f32.gmra.mxu0 %v37
    %v72 = vpop.f32.mrf.mxu0
    %v73 = vadd.f32 0.0, %v72
    %74 = vdwg.mxu0
    %v75 = vmul.f32 %v37, %v37
    %76 = vadd.xlane.f32.xlu0 %v75
    %v77 = vpop.xlane.xlu0 %76
    %v78 = vld [vmem:[%s2] sm:$0x1]
    %v80 = vperm.slane %v78, 0
    %v82 = vadd.f32 %v77, %v80
    %v83 = vadd.f32 %v82, %v73
    %v84 = vmax.f32 %v83, 1e-12
    %v85 = vmin.f32 %v84, 1e+12
    %v86 = vlaneseq
    %v87 = vand.u32 %v86, 127
    %88 = vset.pattern.permute.xlu0 0
    %89 = vperm.xlu0 %88, %v38
    %v90 = vpop.permute.xlu0 %89
    %vm91 = vcmp.eq.s32.totalorder %v90, %v87
    %v92 = vsel %vm91, %v85, 0.0
    %vm93 = vcmp.lt.s32.totalorder %v87, 16
    %v94 = vsel %vm93, 1, 0
    %vm95 = vcmp.eq.s32.totalorder %v94, 1
    %v96 = vsel %vm95, %v85, 0.0
    %v97 = vadd.f32 %v92, 0.0
    %98 = vst [vmem:[#allocation5] sm:$0xff] %v97
    %v99 = vadd.f32 %v96, 0.0
    %100 = vst [vmem:[#allocation6] sm:$0xff] %v99
    // Predicated region
    $region22: #{tpu_custom_call.1} parent=1 // pred_check
      _
    $region23: #{tpu_custom_call.1} parent=1 // pred_check_branch
      %102 = sbr.rel (0) target = $region25
    $region24: #{tpu_custom_call.1} parent=1 // pred_region
      %104 = vsyncadd [#allocation4], 0
      %s106 = sshll.u32 [#allocation5], 4
      %s107 = int_to_ptr.vmem [resolvable:$true] %s106
      %s108 = sshll.u32 %s4, 4
      %s109 = int_to_ptr.hbm [resolvable:$true] %s108
      %111 = dma.vmem_to_hbm [thread:$0]  %s107, 128, %s109, [#allocation4]
    $region25: #{tpu_custom_call.1} parent=1 // pred_fallthru
      _
    // Predicated region
    $region26: #{tpu_custom_call.1} parent=1 // pred_check
      _
    $region27: #{tpu_custom_call.1} parent=1 // pred_check_branch
      %113 = sbr.rel (0) target = $region29
    $region28: #{tpu_custom_call.1} parent=1 // pred_region
      %115 = vsyncadd [#allocation7], 0
      %s117 = sshll.u32 [#allocation6], 4
      %s118 = int_to_ptr.vmem [resolvable:$true] %s117
      %s119 = sshll.u32 %s5, 4
      %s120 = int_to_ptr.hbm [resolvable:$true] %s119
      %122 = dma.vmem_to_hbm [thread:$0]  %s118, 128, %s120, [#allocation7]
    $region29: #{tpu_custom_call.1} parent=1 // pred_fallthru
      _
    // Predicated region
    $region30: #{tpu_custom_call.1} parent=1 // pred_check
      _
    $region31: #{tpu_custom_call.1} parent=1 // pred_check_branch
      %124 = sbr.rel (0) target = $region33
    $region32: #{tpu_custom_call.1} parent=1 // pred_region
      %126 = dma.done [#allocation4], 128
    $region33: #{tpu_custom_call.1} parent=1 // pred_fallthru
      _
    // Predicated region
    $region34: #{tpu_custom_call.1} parent=1 // pred_check
      _
    $region35: #{tpu_custom_call.1} parent=1 // pred_check_branch
      %128 = sbr.rel (0) target = $region37
    $region36: #{tpu_custom_call.1} parent=1 // pred_region
      %130 = dma.done [#allocation7], 128
    $region37: #{tpu_custom_call.1} parent=1 // pred_fallthru
      _
    %131 = vsyncpa [#allocation3], 1
    %132 = vsyncpa [#allocation4], 1
    %133 = vsyncpa [#allocation7], 1

</llo_original>
